<compile_context>
chip_gen: v7x
topology: tpu7x:2x2x1
jax: 0.10.0
libtpu: 0.0.40
codegen_flags: <defaults>
</compile_context>

<pallas_src>
import functools

import jax
import jax.numpy as jnp
from jax import lax
from jax.experimental import pallas as pl
from jax.experimental.pallas import tpu as pltpu


# ----------------------------------------------------------------------------
# Fused kernel (per batch element), lane-flattened activations (rows, W*C)
# ----------------------------------------------------------------------------
def _second_stage(h, k1_ref, ah_ref, bw_ref, s1_ref, b1_ref, out_ref):
    # 1x1 conv FIRST (commutes with the spatial-only upsample); block-diagonal
    # Kron(I_W, w1) keeps the lane-flattened layout (no reshape across lanes).
    z = jnp.dot(h, k1_ref[...], preferred_element_type=jnp.float32)          # (H,  W*Cout)
    # bilinear x2, align_corners=True, as two lane-major matmuls
    u = jnp.dot(ah_ref[...], z, preferred_element_type=jnp.float32)          # (Ho, W*Cout)
    y = jnp.dot(u, bw_ref[...], preferred_element_type=jnp.float32)          # (Ho, Wo*Cout)
    # BN + ReLU epilogue (per-channel scale/shift tiled along lanes), lane-dense store
    out_ref[...] = jnp.maximum(y * s1_ref[0] + b1_ref[0], 0.0)[None]


def _decoder_full_kernel(x_ref, r3_ref, s3_ref, b3_ref, k1_ref, ah_ref, bw_ref,
                         s1_ref, b1_ref, out_ref, xp_ref, *, H, W, Cin):
    WC = W * Cin
    # In-kernel zero halo: only top/bottom rows need padding (the width halo is
    # folded into the banded weight matrix r3).
    zrow = jnp.zeros((1, WC), jnp.float32)
    xp_ref[pl.ds(0, 1), :] = zrow
    xp_ref[pl.ds(H + 1, 1), :] = zrow
    xp_ref[pl.ds(1, H), :] = x_ref[0]
    # 3x3 conv (pad=1) as a SINGLE MXU matmul: (H, 3*W*Cin) @ (3*W*Cin, W*Cin).
    # The three operands are pure sublane-range slices (no lane relayout).
    patch = jnp.concatenate(
        [xp_ref[pl.ds(0, H), :], xp_ref[pl.ds(1, H), :], xp_ref[pl.ds(2, H), :]],
        axis=1)
    h = jnp.dot(patch, r3_ref[...], preferred_element_type=jnp.float32)
    h = jnp.maximum(h * s3_ref[0] + b3_ref[0], 0.0)                          # BN + ReLU
    _second_stage(h, k1_ref, ah_ref, bw_ref, s1_ref, b1_ref, out_ref)


def _decoder_last_kernel(x_ref, k1_ref, ah_ref, bw_ref, s1_ref, b1_ref, out_ref):
    # last=True: the 3x3 stage is skipped by the module
    _second_stage(x_ref[0], k1_ref, ah_ref, bw_ref, s1_ref, b1_ref, out_ref)


# ----------------------------------------------------------------------------
# Lane-flattened operand builders (tiny, built in the wrapper)
# ----------------------------------------------------------------------------
def _banded_conv3_matrix(w3_hwio, W):
    """(3*W*Cin, W*Cout) banded matrix: conv3x3 (stride 1, pad 1) on the
    lane-flattened (H, W*Cin) layout becomes one matmul against the
    row-shift-concatenated patch.  Width zero-padding is encoded in the band."""
    _, _, Cin, Cout = w3_hwio.shape
    a = jnp.arange(W)
    j = jnp.arange(W)
    kw = jnp.arange(3)
    # sel[kw, a, j] = 1 iff input column a == output column j + kw - 1
    sel = (a[None, :, None] == (j[None, None, :] + kw[:, None, None] - 1)).astype(jnp.float32)
    r3 = jnp.einsum('kaj,hkio->haijo', sel, w3_hwio)      # (3, W, Cin, W, Cout)
    return r3.reshape(3 * W * Cin, W * Cout)


def bilinear_matrix(out_size, in_size):
    # align_corners=True interpolation matrix: out = A @ in along one axis
    if out_size == 1 or in_size == 1:
        a = jnp.zeros((out_size, in_size), jnp.float32)
        return a.at[:, 0].set(1.0)
    src = jnp.arange(out_size, dtype=jnp.float32) * (in_size - 1) / (out_size - 1)
    idx = jnp.arange(in_size, dtype=jnp.float32)
    return jnp.maximum(0.0, 1.0 - jnp.abs(src[:, None] - idx[None, :])).astype(jnp.float32)


# ----------------------------------------------------------------------------
# DecoderBlock forward (NCHW in / NCHW out, like the PyTorch module)
# ----------------------------------------------------------------------------
def decoder_block_forward(x_nchw, params, scale=2, last=False):
    N, Cin, H, W = x_nchw.shape
    Cout = params["w1_io"].shape[-1]
    if scale > 1:
        Ho, Wo = H * scale, W * scale
        ah = bilinear_matrix(Ho, H)
        aw = bilinear_matrix(Wo, W)
    else:
        Ho, Wo = H, W
        ah = jnp.eye(H, dtype=jnp.float32)
        aw = jnp.eye(W, dtype=jnp.float32)

    # NCHW -> lane-flattened (N, H, W*Cin).  One small XLA transpose; the kernel
    # itself never reshapes across the lane axis.
    xflat = jnp.transpose(x_nchw.astype(jnp.float32), (0, 2, 3, 1)).reshape(N, H, W * Cin)

    # derived lane-flattened operands
    k1 = jnp.kron(jnp.eye(W, dtype=jnp.float32), params["w1_io"])       # (W*Cin, W*Cout)
    bw = jnp.kron(aw.T, jnp.eye(Cout, dtype=jnp.float32))               # (W*Cout, Wo*Cout)
    s1 = jnp.tile(params["scale1"], Wo)[None, :]                        # (1, Wo*Cout)
    b1 = jnp.tile(params["shift1"], Wo)[None, :]

    out_shape = jax.ShapeDtypeStruct((N, Ho, Wo * Cout), jnp.float32)
    out_spec = pl.BlockSpec((1, Ho, Wo * Cout), lambda n: (n, 0, 0))

    if not last:
        r3 = _banded_conv3_matrix(params["w3_hwio"], W)                 # (3*W*Cin, W*Cin)
        s3 = jnp.tile(params["scale3"], W)[None, :]                     # (1, W*Cin)
        b3 = jnp.tile(params["shift3"], W)[None, :]
        kernel = functools.partial(_decoder_full_kernel, H=H, W=W, Cin=Cin)
        in_specs = [
            pl.BlockSpec((1, H, W * Cin), lambda n: (n, 0, 0)),
            pl.BlockSpec((3 * W * Cin, W * Cin), lambda n: (0, 0)),
            pl.BlockSpec((1, W * Cin), lambda n: (0, 0)),
            pl.BlockSpec((1, W * Cin), lambda n: (0, 0)),
            pl.BlockSpec((W * Cin, W * Cout), lambda n: (0, 0)),
            pl.BlockSpec((Ho, H), lambda n: (0, 0)),
            pl.BlockSpec((W * Cout, Wo * Cout), lambda n: (0, 0)),
            pl.BlockSpec((1, Wo * Cout), lambda n: (0, 0)),
            pl.BlockSpec((1, Wo * Cout), lambda n: (0, 0)),
        ]
        args = (xflat, r3, s3, b3, k1, ah, bw, s1, b1)
        scratch = [pltpu.VMEM((H + 2, W * Cin), jnp.float32)]
    else:
        kernel = _decoder_last_kernel
        in_specs = [
            pl.BlockSpec((1, H, W * Cin), lambda n: (n, 0, 0)),
            pl.BlockSpec((W * Cin, W * Cout), lambda n: (0, 0)),
            pl.BlockSpec((Ho, H), lambda n: (0, 0)),
            pl.BlockSpec((W * Cout, Wo * Cout), lambda n: (0, 0)),
            pl.BlockSpec((1, Wo * Cout), lambda n: (0, 0)),
            pl.BlockSpec((1, Wo * Cout), lambda n: (0, 0)),
        ]
        args = (xflat, k1, ah, bw, s1, b1)
        scratch = []

    # TODO(synk): for production-scale H/W/C add a row-tile grid axis with a 1-row
    # conv halo (and bf16 matmul inputs) so blocks fit v7x's 64 MiB VMEM and the
    # pipeline gets >=4 steps per core.
    yflat = pl.pallas_call(
        kernel,
        out_shape=out_shape,
        grid_spec=pltpu.PrefetchScalarGridSpec(
            num_scalar_prefetch=0,
            grid=(N,),
            in_specs=in_specs,
            out_specs=out_spec,
            scratch_shapes=scratch,
        ),
        compiler_params=pltpu.CompilerParams(dimension_semantics=("parallel",)),
    )(*args)

    y = yflat.reshape(N, Ho, Wo, Cout)
    return jnp.transpose(y, (0, 3, 1, 2))                               # -> NCHW


# ----------------------------------------------------------------------------
# Parameter construction (deterministic, mirrors DecoderBlock.__init__)
# ----------------------------------------------------------------------------
def kaiming_uniform(key, shape_oihw):
    # torch kaiming_uniform_ default: a=0, fan_in mode -> bound = sqrt(6 / fan_in)
    fan_in = shape_oihw[1] * shape_oihw[2] * shape_oihw[3]
    bound = (6.0 / fan_in) ** 0.5
    return jax.random.uniform(key, shape_oihw, jnp.float32, -bound, bound)


def make_params(key, in_planes, out_planes):
    k1, k2, k3, k4 = jax.random.split(key, 4)
    eps = 1e-5
    # conv_3x3: Conv2d(in, in, 3, pad=1, bias=False) + BN(in)
    w3_oihw = kaiming_uniform(k1, (in_planes, in_planes, 3, 3))
    g3 = 1.0 + 0.02 * jax.random.normal(k2, (in_planes,), jnp.float32)
    scale3 = g3 / jnp.sqrt(1.0 + eps)                  # running_var = 1
    shift3 = jnp.zeros((in_planes,), jnp.float32)      # running_mean = 0, beta = 0
    # conv_1x1: Conv2d(in, out, 1, bias=False) + BN(out)
    w1_oihw = kaiming_uniform(k3, (out_planes, in_planes, 1, 1))
    g1 = 1.0 + 0.02 * jax.random.normal(k4, (out_planes,), jnp.float32)
    scale1 = g1 / jnp.sqrt(1.0 + eps)
    shift1 = jnp.zeros((out_planes,), jnp.float32)
    return dict(
        w3_hwio=jnp.transpose(w3_oihw, (2, 3, 1, 0)),              # (3,3,Cin,Cin)
        scale3=scale3, shift3=shift3,
        w1_io=jnp.transpose(w1_oihw, (2, 3, 1, 0))[0, 0],          # (Cin,Cout)
        scale1=scale1, shift1=shift1,
    )


# ----------------------------------------------------------------------------
# Pure-JAX reference (original op order: conv3x3 -> upsample -> conv1x1)
# ----------------------------------------------------------------------------
def reference_forward(x_nchw, params, scale=2, last=False):
    x = jnp.transpose(x_nchw, (0, 2, 3, 1)).astype(jnp.float32)
    if not last:
        z = lax.conv_general_dilated(x, params["w3_hwio"], (1, 1), ((1, 1), (1, 1)),
                                     dimension_numbers=("NHWC", "HWIO", "NHWC"))
        x = jnp.maximum(z * params["scale3"] + params["shift3"], 0.0)
    _, H, W, _ = x.shape
    if scale > 1:
        ah = bilinear_matrix(H * scale, H)
        aw = bilinear_matrix(W * scale, W)
        x = jnp.einsum('Hh,nhwc->nHwc', ah, x)
        x = jnp.einsum('Ww,nhwc->nhWc', aw, x)
    z = jnp.einsum('nhwc,cd->nhwd', x, params["w1_io"])
    y = jnp.maximum(z * params["scale1"] + params["shift1"], 0.0)
    return jnp.transpose(y, (0, 3, 1, 2))


if __name__ == "__main__":
    key = jax.random.PRNGKey(0)
    kx, kp = jax.random.split(key)

    N, in_planes, out_planes, H, W = 2, 8, 4, 16, 16
    x = jax.random.normal(kx, (N, in_planes, H, W), jnp.float32)   # NCHW like torch
    params = make_params(kp, in_planes, out_planes)

    # main path (last=False)
    out = decoder_block_forward(x, params, scale=2, last=False)
    out = jax.block_until_ready(out)
    ref = reference_forward(x, params, scale=2, last=False)
    assert out.shape == (N, out_planes, H * 2, W * 2), out.shape
    err = float(jnp.max(jnp.abs(out - ref)))
    assert err < 2e-4, err

    # last=True path (3x3 stage skipped, as in the module)
    out_last = decoder_block_forward(x, params, scale=2, last=True)
    out_last = jax.block_until_ready(out_last)
    ref_last = reference_forward(x, params, scale=2, last=True)
    err_last = float(jnp.max(jnp.abs(out_last - ref_last)))
    assert err_last < 2e-4, err_last

    print("KERNEL_OK")
</pallas_src>

<mosaic_0001>
module attributes {stable_mosaic.version = 11 : i64} {
  func.func @_decoder_full_kernel(%arg0: i32, %arg1: memref<1x16x128xf32, #tpu.memory_space<vmem>>, %arg2: memref<384x128xf32, #tpu.memory_space<vmem>>, %arg3: memref<1x128xf32, #tpu.memory_space<vmem>>, %arg4: memref<1x128xf32, #tpu.memory_space<vmem>>, %arg5: memref<128x64xf32, #tpu.memory_space<vmem>>, %arg6: memref<32x16xf32, #tpu.memory_space<vmem>>, %arg7: memref<64x128xf32, #tpu.memory_space<vmem>>, %arg8: memref<1x128xf32, #tpu.memory_space<vmem>>, %arg9: memref<1x128xf32, #tpu.memory_space<vmem>>, %arg10: memref<1x32x128xf32, #tpu.memory_space<vmem>>, %arg11: memref<18x128xf32, #tpu.memory_space<vmem>>) attributes {dimension_semantics = [#tpu.dimension_semantics<parallel>], iteration_bounds = array<i64: 2>, scalar_prefetch = 0 : i64, scratch_operands = 1 : i64, tpu.core_type = #tpu.core_type<tc>, window_params = [{transform_indices = @transform_0, window_bounds = array<i64: 1, 16, 128>}, {pipeline_mode = #tpu.pipeline_mode<synchronous>, transform_indices = @transform_1, window_bounds = array<i64: 384, 128>}, {pipeline_mode = #tpu.pipeline_mode<synchronous>, transform_indices = @transform_2, window_bounds = array<i64: 1, 128>}, {pipeline_mode = #tpu.pipeline_mode<synchronous>, transform_indices = @transform_3, window_bounds = array<i64: 1, 128>}, {pipeline_mode = #tpu.pipeline_mode<synchronous>, transform_indices = @transform_4, window_bounds = array<i64: 128, 64>}, {pipeline_mode = #tpu.pipeline_mode<synchronous>, transform_indices = @transform_5, window_bounds = array<i64: 32, 16>}, {pipeline_mode = #tpu.pipeline_mode<synchronous>, transform_indices = @transform_6, window_bounds = array<i64: 64, 128>}, {pipeline_mode = #tpu.pipeline_mode<synchronous>, transform_indices = @transform_7, window_bounds = array<i64: 1, 128>}, {pipeline_mode = #tpu.pipeline_mode<synchronous>, transform_indices = @transform_8, window_bounds = array<i64: 1, 128>}, {transform_indices = @transform_9, window_bounds = array<i64: 1, 32, 128>}]} {
    %cst = arith.constant 0.000000e+00 : f32
    %0 = vector.broadcast %cst : f32 to vector<1x128xf32>
    %c0 = arith.constant 0 : index
    %c0_0 = arith.constant 0 : index
    %1 = vector.load %arg11[%c0, %c0_0] : memref<18x128xf32, #tpu.memory_space<vmem>>, vector<1x128xf32>
    tpu.vector_store %arg11[%c0, %c0_0], %0 {strides = array<i32>} : memref<18x128xf32, #tpu.memory_space<vmem>>, vector<1x128xf32>,
    %c17 = arith.constant 17 : index
    %c0_1 = arith.constant 0 : index
    %2 = vector.load %arg11[%c17, %c0_1] : memref<18x128xf32, #tpu.memory_space<vmem>>, vector<1x128xf32>
    tpu.vector_store %arg11[%c17, %c0_1], %0 {strides = array<i32>} : memref<18x128xf32, #tpu.memory_space<vmem>>, vector<1x128xf32>,
    %c0_2 = arith.constant 0 : index
    %c0_3 = arith.constant 0 : index
    %c0_4 = arith.constant 0 : index
    %3 = vector.load %arg1[%c0_2, %c0_3, %c0_4] : memref<1x16x128xf32, #tpu.memory_space<vmem>>, vector<1x16x128xf32>
    %4 = vector.shape_cast %3 : vector<1x16x128xf32> to vector<16x128xf32>
    %c1 = arith.constant 1 : index
    %c0_5 = arith.constant 0 : index
    %5 = vector.load %arg11[%c1, %c0_5] : memref<18x128xf32, #tpu.memory_space<vmem>>, vector<16x128xf32>
    tpu.vector_store %arg11[%c1, %c0_5], %4 {strides = array<i32>} : memref<18x128xf32, #tpu.memory_space<vmem>>, vector<16x128xf32>,
    %c0_6 = arith.constant 0 : index
    %c0_7 = arith.constant 0 : index
    %6 = vector.load %arg11[%c0_6, %c0_7] : memref<18x128xf32, #tpu.memory_space<vmem>>, vector<16x128xf32>
    %c1_8 = arith.constant 1 : index
    %c0_9 = arith.constant 0 : index
    %7 = vector.load %arg11[%c1_8, %c0_9] : memref<18x128xf32, #tpu.memory_space<vmem>>, vector<16x128xf32>
    %c2 = arith.constant 2 : index
    %c0_10 = arith.constant 0 : index
    %8 = vector.load %arg11[%c2, %c0_10] : memref<18x128xf32, #tpu.memory_space<vmem>>, vector<16x128xf32>
    %9 = tpu.concatenate %6, %7, %8 in 1 : vector<16x128xf32>, vector<16x128xf32>, vector<16x128xf32> -> vector<16x384xf32>
    %c0_11 = arith.constant 0 : index
    %c0_12 = arith.constant 0 : index
    %10 = vector.load %arg2[%c0_11, %c0_12] : memref<384x128xf32, #tpu.memory_space<vmem>>, vector<384x128xf32>
    %cst_13 = arith.constant dense<0.000000e+00> : vector<16x128xf32>
    %11 = tpu.matmul %9, %10, %cst_13 {dimension_numbers = #tpu.dot_dimension_numbers<[1], [0], [0], [1], [0, 0, 1, 1], [], []>} : vector<16x384xf32>, vector<384x128xf32>, vector<16x128xf32> -> vector<16x128xf32>
    %c0_14 = arith.constant 0 : index
    %c0_15 = arith.constant 0 : index
    %12 = vector.load %arg3[%c0_14, %c0_15] : memref<1x128xf32, #tpu.memory_space<vmem>>, vector<1x128xf32>
    %13 = vector.shape_cast %12 : vector<1x128xf32> to vector<128xf32>
    %14 = vector.shape_cast %13 : vector<128xf32> to vector<1x128xf32>
    %15 = vector.broadcast %14 : vector<1x128xf32> to vector<16x128xf32>
    %16 = arith.mulf %11, %15 : vector<16x128xf32>
    %c0_16 = arith.constant 0 : index
    %c0_17 = arith.constant 0 : index
    %17 = vector.load %arg4[%c0_16, %c0_17] : memref<1x128xf32, #tpu.memory_space<vmem>>, vector<1x128xf32>
    %18 = vector.shape_cast %17 : vector<1x128xf32> to vector<128xf32>
    %19 = vector.shape_cast %18 : vector<128xf32> to vector<1x128xf32>
    %20 = vector.broadcast %19 : vector<1x128xf32> to vector<16x128xf32>
    %21 = arith.addf %16, %20 : vector<16x128xf32>
    %cst_18 = arith.constant 0.000000e+00 : f32
    %22 = vector.broadcast %cst_18 : f32 to vector<16x128xf32>
    %23 = arith.maximumf %21, %22 : vector<16x128xf32>
    %c0_19 = arith.constant 0 : index
    %c0_20 = arith.constant 0 : index
    %24 = vector.load %arg5[%c0_19, %c0_20] : memref<128x64xf32, #tpu.memory_space<vmem>>, vector<128x64xf32>
    %cst_21 = arith.constant dense<0.000000e+00> : vector<16x64xf32>
    %25 = tpu.matmul %23, %24, %cst_21 {dimension_numbers = #tpu.dot_dimension_numbers<[1], [0], [0], [1], [0, 0, 1, 1], [], []>} : vector<16x128xf32>, vector<128x64xf32>, vector<16x64xf32> -> vector<16x64xf32>
    %c0_22 = arith.constant 0 : index
    %c0_23 = arith.constant 0 : index
    %26 = vector.load %arg6[%c0_22, %c0_23] : memref<32x16xf32, #tpu.memory_space<vmem>>, vector<32x16xf32>
    %cst_24 = arith.constant dense<0.000000e+00> : vector<32x64xf32>
    %27 = tpu.matmul %26, %25, %cst_24 {dimension_numbers = #tpu.dot_dimension_numbers<[1], [0], [0], [1], [0, 0, 1, 1], [], []>} : vector<32x16xf32>, vector<16x64xf32>, vector<32x64xf32> -> vector<32x64xf32>
    %c0_25 = arith.constant 0 : index
    %c0_26 = arith.constant 0 : index
    %28 = vector.load %arg7[%c0_25, %c0_26] : memref<64x128xf32, #tpu.memory_space<vmem>>, vector<64x128xf32>
    %cst_27 = arith.constant dense<0.000000e+00> : vector<32x128xf32>
    %29 = tpu.matmul %27, %28, %cst_27 {dimension_numbers = #tpu.dot_dimension_numbers<[1], [0], [0], [1], [0, 0, 1, 1], [], []>} : vector<32x64xf32>, vector<64x128xf32>, vector<32x128xf32> -> vector<32x128xf32>
    %c0_28 = arith.constant 0 : index
    %c0_29 = arith.constant 0 : index
    %30 = vector.load %arg8[%c0_28, %c0_29] : memref<1x128xf32, #tpu.memory_space<vmem>>, vector<1x128xf32>
    %31 = vector.shape_cast %30 : vector<1x128xf32> to vector<128xf32>
    %32 = vector.shape_cast %31 : vector<128xf32> to vector<1x128xf32>
    %33 = vector.broadcast %32 : vector<1x128xf32> to vector<32x128xf32>
    %34 = arith.mulf %29, %33 : vector<32x128xf32>
    %c0_30 = arith.constant 0 : index
    %c0_31 = arith.constant 0 : index
    %35 = vector.load %arg9[%c0_30, %c0_31] : memref<1x128xf32, #tpu.memory_space<vmem>>, vector<1x128xf32>
    %36 = vector.shape_cast %35 : vector<1x128xf32> to vector<128xf32>
    %37 = vector.shape_cast %36 : vector<128xf32> to vector<1x128xf32>
    %38 = vector.broadcast %37 : vector<1x128xf32> to vector<32x128xf32>
    %39 = arith.addf %34, %38 : vector<32x128xf32>
    %cst_32 = arith.constant 0.000000e+00 : f32
    %40 = vector.broadcast %cst_32 : f32 to vector<32x128xf32>
    %41 = arith.maximumf %39, %40 : vector<32x128xf32>
    %42 = vector.shape_cast %41 : vector<32x128xf32> to vector<1x32x128xf32>
    %c0_33 = arith.constant 0 : index
    %c0_34 = arith.constant 0 : index
    %c0_35 = arith.constant 0 : index
    %43 = vector.load %arg10[%c0_33, %c0_34, %c0_35] : memref<1x32x128xf32, #tpu.memory_space<vmem>>, vector<1x32x128xf32>
    tpu.vector_store %arg10[%c0_33, %c0_34, %c0_35], %42 {strides = array<i32>} : memref<1x32x128xf32, #tpu.memory_space<vmem>>, vector<1x32x128xf32>,
    return
  }
  func.func @transform_0(%arg0: i32) -> (i32, i32, i32) {
    %c0_i32 = arith.constant 0 : i32
    %c0_i32_0 = arith.constant 0 : i32
    %c0_i32_1 = arith.constant 0 : i32
    return %arg0, %c0_i32, %c0_i32_0 : i32, i32, i32
  }
  func.func @transform_1(%arg0: i32) -> (i32, i32) {
    %c0_i32 = arith.constant 0 : i32
    %c0_i32_0 = arith.constant 0 : i32
    %c0_i32_1 = arith.constant 0 : i32
    return %c0_i32, %c0_i32_0 : i32, i32
  }
  func.func @transform_2(%arg0: i32) -> (i32, i32) {
    %c0_i32 = arith.constant 0 : i32
    %c0_i32_0 = arith.constant 0 : i32
    %c0_i32_1 = arith.constant 0 : i32
    return %c0_i32, %c0_i32_0 : i32, i32
  }
  func.func @transform_3(%arg0: i32) -> (i32, i32) {
    %c0_i32 = arith.constant 0 : i32
    %c0_i32_0 = arith.constant 0 : i32
    %c0_i32_1 = arith.constant 0 : i32
    return %c0_i32, %c0_i32_0 : i32, i32
  }
  func.func @transform_4(%arg0: i32) -> (i32, i32) {
    %c0_i32 = arith.constant 0 : i32
    %c0_i32_0 = arith.constant 0 : i32
    %c0_i32_1 = arith.constant 0 : i32
    return %c0_i32, %c0_i32_0 : i32, i32
  }
  func.func @transform_5(%arg0: i32) -> (i32, i32) {
    %c0_i32 = arith.constant 0 : i32
    %c0_i32_0 = arith.constant 0 : i32
    %c0_i32_1 = arith.constant 0 : i32
    return %c0_i32, %c0_i32_0 : i32, i32
  }
  func.func @transform_6(%arg0: i32) -> (i32, i32) {
    %c0_i32 = arith.constant 0 : i32
    %c0_i32_0 = arith.constant 0 : i32
    %c0_i32_1 = arith.constant 0 : i32
    return %c0_i32, %c0_i32_0 : i32, i32
  }
  func.func @transform_7(%arg0: i32) -> (i32, i32) {
    %c0_i32 = arith.constant 0 : i32
    %c0_i32_0 = arith.constant 0 : i32
    %c0_i32_1 = arith.constant 0 : i32
    return %c0_i32, %c0_i32_0 : i32, i32
  }
  func.func @transform_8(%arg0: i32) -> (i32, i32) {
    %c0_i32 = arith.constant 0 : i32
    %c0_i32_0 = arith.constant 0 : i32
    %c0_i32_1 = arith.constant 0 : i32
    return %c0_i32, %c0_i32_0 : i32, i32
  }
  func.func @transform_9(%arg0: i32) -> (i32, i32, i32) {
    %c0_i32 = arith.constant 0 : i32
    %c0_i32_0 = arith.constant 0 : i32
    %c0_i32_1 = arith.constant 0 : i32
    return %arg0, %c0_i32, %c0_i32_0 : i32, i32, i32
  }
}

</mosaic_0001>

<llo_original>
// kernel: tpu_custom_call.1
$region0: #{tpu_custom_call.1}
  #allocation0 [shape = 'u32[]', space=smem, size = 0x4, offset = 0x4, fixed_abs, tag = 'smem constant byte address 0x4 - core index']
  #allocation1 [shape = 'u32[144,128]{1,0:T(1,128)}', space=vmem, size = 0x12000, scoped, tag = 'internal scratch']
  #allocation2 [shape = 'f32[18,128]{1,0:T(8,128)}', space=vmem, size = 0x3000, scoped, tag = 'scratch operand']
  %s0 = inlined_call_operand.vmem [shape: f32[2,16,128], index: 0, kind: input, shape index: {}]
  %s1 = inlined_call_operand.hbm [shape: f32[384,128], index: 1, kind: input, shape index: {}]
  %s2 = inlined_call_operand.vmem [shape: f32[1,128], index: 2, kind: input, shape index: {}]
  %s3 = inlined_call_operand.vmem [shape: f32[1,128], index: 3, kind: input, shape index: {}]
  %s4 = inlined_call_operand.vmem [shape: f32[128,64], index: 4, kind: input, shape index: {}]
  %s5 = inlined_call_operand.vmem [shape: f32[32,16], index: 5, kind: input, shape index: {}]
  %s6 = inlined_call_operand.vmem [shape: f32[64,128], index: 6, kind: input, shape index: {}]
  %s7 = inlined_call_operand.vmem [shape: f32[1,128], index: 7, kind: input, shape index: {}]
  %s8 = inlined_call_operand.vmem [shape: f32[1,128], index: 8, kind: input, shape index: {}]
  %s9 = inlined_call_operand.hbm [shape: f32[2,32,128], index: 9, kind: output, shape index: {}]
  %s10 = sld [smem:[#allocation0]]
  $region73: #{tpu_custom_call.1} parent=0
    _
  %s12 = ssub.s32 1, %s10
  %s13 = scalar_select 0, %s12, %s10
  $region1: #{tpu_custom_call.1} parent=0
    #allocation3 [shape = 'u8[196608]{0}', space=vmem, size = 0x30000, scoped, tag = 'input window, operand 1, single buffered']
    #allocation4 [shape = 's32[2]{0}', space=sflag, size = 0x8, scoped, tag = 'scoped memory for tpu_custom_call.1']
    #allocation5 [shape = 's32[2]{0}', space=sflag, size = 0x8, scoped, tag = 'scoped memory for tpu_custom_call.1']
    #allocation6 [shape = 'u8[32768]{0}', space=vmem, size = 0x8000, scoped, tag = 'output window, operand 0']
    %14 = vsyncpa [#allocation4], 0
    %15 = vsyncpa [#allocation5], 0
    %s16 = scalar_lea.sflag [#allocation5], 1
    %17 = vsyncpa %s16, 0
    loop: start=0, step=1, limit=4
    $region2: #{tpu_custom_call.1} parent=1 // loop_pre_header
      _
    $region3: #{tpu_custom_call.1} parent=1 // loop_header
      %s19 = sphi 0, %s23
      %p20 = scmp.ge.s32.totalorder %s19, 4
      %s29 = sphi 0, %s31
      %s32 = sphi 0, %s29
      %s33 = sphi 0, %s32
      %s49 = sphi 0, %s33
      %s53 = sphi 0, %s53
      %s55 = sphi 0, %s53
      %s56 = sphi 0, %s55
      %s70 = sphi 0, %s56
      %s74 = sphi 0, %s74
      %s76 = sphi 0, %s74
      %s77 = sphi 0, %s76
      %s91 = sphi 0, %s77
      %s95 = sphi 0, %s95
      %s97 = sphi 0, %s95
      %s98 = sphi 0, %s97
      %s112 = sphi 0, %s98
      %s116 = sphi 0, %s116
      %s118 = sphi 0, %s116
      %s119 = sphi 0, %s118
      %s133 = sphi 0, %s119
      %s137 = sphi 0, %s137
      %s139 = sphi 0, %s137
      %s140 = sphi 0, %s139
      %s154 = sphi 0, %s140
      %s158 = sphi 0, %s158
      %s160 = sphi 0, %s158
      %s161 = sphi 0, %s160
      %s175 = sphi 0, %s161
      %s179 = sphi 0, %s179
      %s181 = sphi 0, %s179
      %s182 = sphi 0, %s181
      %s196 = sphi 0, %s182
      %s200 = sphi 0, %s200
      %s202 = sphi 0, %s200
      %s203 = sphi 0, %s202
      %s217 = sphi 0, %s203
      %s223 = sphi 0, %s225
      %s226 = sphi 0, %s223
      %s227 = sphi 0, %s226
      %s243 = sphi 0, %s227
    $region4: #{tpu_custom_call.1} parent=1 // loop_header_branch
      %22 = sbr.rel (%p20) target = $region8
    $region5: #{tpu_custom_call.1} parent=1 // loop_body
      %s24 = ssub.s32 %s19, 1
      %s25 = ssub.s32 %s19, 2
      %s26 = sadd.s32 %s19, 1
      %s27 = ssub.s32 %s19, %s26
      %p28 = scmp.eq.s32.totalorder %s27, 0
      %s30 = sadd.s32 %s29, 1
      %s31 = scalar_select %p28, %s29, %s30
      %p34 = pneg %p28
      %p35 = scmp.eq.s32.totalorder %s19, 1
      %p36 = por %p34, %p35
      %p37 = scmp.ne.s32.totalorder %s29, %s32
      %p38 = scmp.eq.s32.totalorder %s19, 0
      %p39 = por %p37, %p38
      %p40 = scmp.ne.s32.totalorder %s29, %s32
      %p41 = scmp.eq.s32.totalorder %s24, 1
      %p42 = por %p40, %p41
      %p43 = scmp.ne.s32.totalorder %s32, %s33
      %p44 = scmp.eq.s32.totalorder %s24, 0
      %p45 = por %p43, %p44
      %p46 = scmp.ne.s32.totalorder %s32, %s33
      %p47 = scmp.eq.s32.totalorder %s25, 1
      %p48 = por %p46, %p47
      %p50 = scmp.ne.s32.totalorder %s33, %s49
      %p51 = scmp.eq.s32.totalorder %s25, 0
      %p52 = por %p50, %p51
      %s54 = sadd.s32 %s53, 1
      %p57 = scmp.eq.s32.totalorder %s19, 1
      %p58 = scmp.ne.s32.totalorder %s53, %s55
      %p59 = scmp.eq.s32.totalorder %s19, 0
      %p60 = por %p58, %p59
      %p61 = scmp.ne.s32.totalorder %s53, %s55
      %p62 = scmp.eq.s32.totalorder %s24, 1
      %p63 = por %p61, %p62
      %p64 = scmp.ne.s32.totalorder %s55, %s56
      %p65 = scmp.eq.s32.totalorder %s24, 0
      %p66 = por %p64, %p65
      %p67 = scmp.ne.s32.totalorder %s55, %s56
      %p68 = scmp.eq.s32.totalorder %s25, 1
      %p69 = por %p67, %p68
      %p71 = scmp.ne.s32.totalorder %s56, %s70
      %p72 = scmp.eq.s32.totalorder %s25, 0
      %p73 = por %p71, %p72
      %s75 = sadd.s32 %s74, 1
      %p78 = scmp.eq.s32.totalorder %s19, 1
      %p79 = scmp.ne.s32.totalorder %s74, %s76
      %p80 = scmp.eq.s32.totalorder %s19, 0
      %p81 = por %p79, %p80
      %p82 = scmp.ne.s32.totalorder %s74, %s76
      %p83 = scmp.eq.s32.totalorder %s24, 1
      %p84 = por %p82, %p83
      %p85 = scmp.ne.s32.totalorder %s76, %s77
      %p86 = scmp.eq.s32.totalorder %s24, 0
      %p87 = por %p85, %p86
      %p88 = scmp.ne.s32.totalorder %s76, %s77
      %p89 = scmp.eq.s32.totalorder %s25, 1
      %p90 = por %p88, %p89
      %p92 = scmp.ne.s32.totalorder %s77, %s91
      %p93 = scmp.eq.s32.totalorder %s25, 0
      %p94 = por %p92, %p93
      %s96 = sadd.s32 %s95, 1
      %p99 = scmp.eq.s32.totalorder %s19, 1
      %p100 = scmp.ne.s32.totalorder %s95, %s97
      %p101 = scmp.eq.s32.totalorder %s19, 0
      %p102 = por %p100, %p101
      %p103 = scmp.ne.s32.totalorder %s95, %s97
      %p104 = scmp.eq.s32.totalorder %s24, 1
      %p105 = por %p103, %p104
      %p106 = scmp.ne.s32.totalorder %s97, %s98
      %p107 = scmp.eq.s32.totalorder %s24, 0
      %p108 = por %p106, %p107
      %p109 = scmp.ne.s32.totalorder %s97, %s98
      %p110 = scmp.eq.s32.totalorder %s25, 1
      %p111 = por %p109, %p110
      %p113 = scmp.ne.s32.totalorder %s98, %s112
      %p114 = scmp.eq.s32.totalorder %s25, 0
      %p115 = por %p113, %p114
      %s117 = sadd.s32 %s116, 1
      %p120 = scmp.eq.s32.totalorder %s19, 1
      %p121 = scmp.ne.s32.totalorder %s116, %s118
      %p122 = scmp.eq.s32.totalorder %s19, 0
      %p123 = por %p121, %p122
      %p124 = scmp.ne.s32.totalorder %s116, %s118
      %p125 = scmp.eq.s32.totalorder %s24, 1
      %p126 = por %p124, %p125
      %p127 = scmp.ne.s32.totalorder %s118, %s119
      %p128 = scmp.eq.s32.totalorder %s24, 0
      %p129 = por %p127, %p128
      %p130 = scmp.ne.s32.totalorder %s118, %s119
      %p131 = scmp.eq.s32.totalorder %s25, 1
      %p132 = por %p130, %p131
      %p134 = scmp.ne.s32.totalorder %s119, %s133
      %p135 = scmp.eq.s32.totalorder %s25, 0
      %p136 = por %p134, %p135
      %s138 = sadd.s32 %s137, 1
      %p141 = scmp.eq.s32.totalorder %s19, 1
      %p142 = scmp.ne.s32.totalorder %s137, %s139
      %p143 = scmp.eq.s32.totalorder %s19, 0
      %p144 = por %p142, %p143
      %p145 = scmp.ne.s32.totalorder %s137, %s139
      %p146 = scmp.eq.s32.totalorder %s24, 1
      %p147 = por %p145, %p146
      %p148 = scmp.ne.s32.totalorder %s139, %s140
      %p149 = scmp.eq.s32.totalorder %s24, 0
      %p150 = por %p148, %p149
      %p151 = scmp.ne.s32.totalorder %s139, %s140
      %p152 = scmp.eq.s32.totalorder %s25, 1
      %p153 = por %p151, %p152
      %p155 = scmp.ne.s32.totalorder %s140, %s154
      %p156 = scmp.eq.s32.totalorder %s25, 0
      %p157 = por %p155, %p156
      %s159 = sadd.s32 %s158, 1
      %p162 = scmp.eq.s32.totalorder %s19, 1
      %p163 = scmp.ne.s32.totalorder %s158, %s160
      %p164 = scmp.eq.s32.totalorder %s19, 0
      %p165 = por %p163, %p164
      %p166 = scmp.ne.s32.totalorder %s158, %s160
      %p167 = scmp.eq.s32.totalorder %s24, 1
      %p168 = por %p166, %p167
      %p169 = scmp.ne.s32.totalorder %s160, %s161
      %p170 = scmp.eq.s32.totalorder %s24, 0
      %p171 = por %p169, %p170
      %p172 = scmp.ne.s32.totalorder %s160, %s161
      %p173 = scmp.eq.s32.totalorder %s25, 1
      %p174 = por %p172, %p173
      %p176 = scmp.ne.s32.totalorder %s161, %s175
      %p177 = scmp.eq.s32.totalorder %s25, 0
      %p178 = por %p176, %p177
      %s180 = sadd.s32 %s179, 1
      %p183 = scmp.eq.s32.totalorder %s19, 1
      %p184 = scmp.ne.s32.totalorder %s179, %s181
      %p185 = scmp.eq.s32.totalorder %s19, 0
      %p186 = por %p184, %p185
      %p187 = scmp.ne.s32.totalorder %s179, %s181
      %p188 = scmp.eq.s32.totalorder %s24, 1
      %p189 = por %p187, %p188
      %p190 = scmp.ne.s32.totalorder %s181, %s182
      %p191 = scmp.eq.s32.totalorder %s24, 0
      %p192 = por %p190, %p191
      %p193 = scmp.ne.s32.totalorder %s181, %s182
      %p194 = scmp.eq.s32.totalorder %s25, 1
      %p195 = por %p193, %p194
      %p197 = scmp.ne.s32.totalorder %s182, %s196
      %p198 = scmp.eq.s32.totalorder %s25, 0
      %p199 = por %p197, %p198
      %s201 = sadd.s32 %s200, 1
      %p204 = scmp.eq.s32.totalorder %s19, 1
      %p205 = scmp.ne.s32.totalorder %s200, %s202
      %p206 = scmp.eq.s32.totalorder %s19, 0
      %p207 = por %p205, %p206
      %p208 = scmp.ne.s32.totalorder %s200, %s202
      %p209 = scmp.eq.s32.totalorder %s24, 1
      %p210 = por %p208, %p209
      %p211 = scmp.ne.s32.totalorder %s202, %s203
      %p212 = scmp.eq.s32.totalorder %s24, 0
      %p213 = por %p211, %p212
      %p214 = scmp.ne.s32.totalorder %s202, %s203
      %p215 = scmp.eq.s32.totalorder %s25, 1
      %p216 = por %p214, %p215
      %p218 = scmp.ne.s32.totalorder %s203, %s217
      %p219 = scmp.eq.s32.totalorder %s25, 0
      %p220 = por %p218, %p219
      %s221 = ssub.s32 %s19, %s26
      %p222 = scmp.eq.s32.totalorder %s221, 0
      %s224 = sadd.s32 %s223, 1
      %s225 = scalar_select %p222, %s223, %s224
      %p228 = pneg %p222
      %p229 = scmp.eq.s32.totalorder %s19, 1
      %p230 = por %p228, %p229
      %p231 = scmp.ne.s32.totalorder %s223, %s226
      %p232 = scmp.eq.s32.totalorder %s19, 0
      %p233 = por %p231, %p232
      %p234 = scmp.ne.s32.totalorder %s223, %s226
      %p235 = scmp.eq.s32.totalorder %s24, 1
      %p236 = por %p234, %p235
      %p237 = scmp.ne.s32.totalorder %s226, %s227
      %p238 = scmp.eq.s32.totalorder %s24, 0
      %p239 = por %p237, %p238
      %p240 = scmp.ne.s32.totalorder %s226, %s227
      %p241 = scmp.eq.s32.totalorder %s25, 1
      %p242 = por %p240, %p241
      %p244 = scmp.ne.s32.totalorder %s227, %s243
      %p245 = scmp.eq.s32.totalorder %s25, 0
      %p246 = por %p244, %p245
      %p247 = scmp.le.s32.totalorder 1, %s19
      %p248 = scmp.lt.s32.totalorder %s19, 3
      %p249 = pnand %p247, %p248
      %p250 = pneg %p249
      // Predicated region
      $region9: #{tpu_custom_call.1} parent=5 // pred_check
        _
      $region10: #{tpu_custom_call.1} parent=5 // pred_check_branch
        %252 = sbr.rel (%p249) target = $region12
      $region11: #{tpu_custom_call.1} parent=5 // pred_region
        %s253 = ssub.s32 %s19, 1
        // Predicated region
        $region13: #{tpu_custom_call.1} parent=11 // pred_check
          %p254 = pneg %p66
        $region14: #{tpu_custom_call.1} parent=11 // pred_check_branch
          %256 = sbr.rel (%p254) target = $region16
        $region15: #{tpu_custom_call.1} parent=11 // pred_region
          %s258 = ssub.s32 6144, 6144
          %259 = vsyncadd [#allocation4], %s258
          %s260 = sshll.u32 [#allocation3], 4
          %s261 = int_to_ptr.vmem [resolvable:$true] %s260
          %266 = dma.hbm_to_vmem [thread:$0]  %s1, 6144, %s261, [#allocation4], 128, 128, 8
        $region16: #{tpu_custom_call.1} parent=11 // pred_fallthru
          _
        // Predicated region
        $region17: #{tpu_custom_call.1} parent=11 // pred_check
          %p267 = pneg %p87
        $region18: #{tpu_custom_call.1} parent=11 // pred_check_branch
          %269 = sbr.rel (%p267) target = $region20
        $region19: #{tpu_custom_call.1} parent=11 // pred_region
          _
        $region20: #{tpu_custom_call.1} parent=11 // pred_fallthru
          _
        // Predicated region
        $region21: #{tpu_custom_call.1} parent=11 // pred_check
          %p270 = pneg %p108
        $region22: #{tpu_custom_call.1} parent=11 // pred_check_branch
          %272 = sbr.rel (%p270) target = $region24
        $region23: #{tpu_custom_call.1} parent=11 // pred_region
          _
        $region24: #{tpu_custom_call.1} parent=11 // pred_fallthru
          _
        // Predicated region
        $region25: #{tpu_custom_call.1} parent=11 // pred_check
          %p273 = pneg %p129
        $region26: #{tpu_custom_call.1} parent=11 // pred_check_branch
          %275 = sbr.rel (%p273) target = $region28
        $region27: #{tpu_custom_call.1} parent=11 // pred_region
          _
        $region28: #{tpu_custom_call.1} parent=11 // pred_fallthru
          _
        // Predicated region
        $region29: #{tpu_custom_call.1} parent=11 // pred_check
          %p276 = pneg %p150
        $region30: #{tpu_custom_call.1} parent=11 // pred_check_branch
          %278 = sbr.rel (%p276) target = $region32
        $region31: #{tpu_custom_call.1} parent=11 // pred_region
          _
        $region32: #{tpu_custom_call.1} parent=11 // pred_fallthru
          _
        // Predicated region
        $region33: #{tpu_custom_call.1} parent=11 // pred_check
          %p279 = pneg %p171
        $region34: #{tpu_custom_call.1} parent=11 // pred_check_branch
          %281 = sbr.rel (%p279) target = $region36
        $region35: #{tpu_custom_call.1} parent=11 // pred_region
          _
        $region36: #{tpu_custom_call.1} parent=11 // pred_fallthru
          _
        // Predicated region
        $region37: #{tpu_custom_call.1} parent=11 // pred_check
          %p282 = pneg %p192
        $region38: #{tpu_custom_call.1} parent=11 // pred_check_branch
          %284 = sbr.rel (%p282) target = $region40
        $region39: #{tpu_custom_call.1} parent=11 // pred_region
          _
        $region40: #{tpu_custom_call.1} parent=11 // pred_fallthru
          _
        // Predicated region
        $region41: #{tpu_custom_call.1} parent=11 // pred_check
          %p285 = pneg %p213
        $region42: #{tpu_custom_call.1} parent=11 // pred_check_branch
          %287 = sbr.rel (%p285) target = $region44
        $region43: #{tpu_custom_call.1} parent=11 // pred_region
          _
        $region44: #{tpu_custom_call.1} parent=11 // pred_fallthru
          _
      $region12: #{tpu_custom_call.1} parent=5 // pred_fallthru
        _
      %p288 = scmp.lt.s32.totalorder %s19, 2
      // Predicated region
      $region45: #{tpu_custom_call.1} parent=5 // pred_check
        %p289 = pneg %p288
      $region46: #{tpu_custom_call.1} parent=5 // pred_check_branch
        %291 = sbr.rel (%p289) target = $region48
      $region47: #{tpu_custom_call.1} parent=5 // pred_region
        // Predicated region
        $region49: #{tpu_custom_call.1} parent=47 // pred_check
          %p292 = pneg %p39
        $region50: #{tpu_custom_call.1} parent=47 // pred_check_branch
          %294 = sbr.rel (%p292) target = $region52
        $region51: #{tpu_custom_call.1} parent=47 // pred_region
          %p295 = scmp.lt.s32.totalorder %s19, 1
          %s296 = scalar_select %p295, %s19, 1
          %s297 = smul.addr %s296, 2
          %s298 = smul.addr %s297, 8
          %s299 = scalar_lea.vmem %s0, %s298
        $region52: #{tpu_custom_call.1} parent=47 // pred_fallthru
          _
      $region48: #{tpu_custom_call.1} parent=5 // pred_fallthru
        _
      %p300 = scmp.le.s32.totalorder 1, %s19
      %p301 = scmp.lt.s32.totalorder %s19, 3
      %p302 = pnand %p300, %p301
      %p303 = pneg %p302
      // Predicated region
      $region53: #{tpu_custom_call.1} parent=5 // pred_check
        _
      $region54: #{tpu_custom_call.1} parent=5 // pred_check_branch
        %305 = sbr.rel (%p302) target = $region56
      $region55: #{tpu_custom_call.1} parent=5 // pred_region
        %s306 = ssub.s32 %s19, 1
        // Predicated region
        $region57: #{tpu_custom_call.1} parent=55 // pred_check
          %p307 = pneg %p66
        $region58: #{tpu_custom_call.1} parent=55 // pred_check_branch
          %309 = sbr.rel (%p307) target = $region60
        $region59: #{tpu_custom_call.1} parent=55 // pred_region
          %310 = dma.done [#allocation4], 6144
        $region60: #{tpu_custom_call.1} parent=55 // pred_fallthru
          _
        %p311 = scmp.lt.s32.totalorder %s24, 1
        %s312 = scalar_select %p311, %s24, 1
        %s313 = smul.addr %s312, 2
        %s314 = smul.addr %s313, 8
        %s315 = scalar_lea.vmem %s0, %s314
        %p316 = pneg %p45
        %p317 = pneg %p42
        %p318 = pneg %p66
        %p319 = pneg %p63
        %p320 = pneg %p87
        %p321 = pneg %p84
        %p322 = pneg %p108
        %p323 = pneg %p105
        %p324 = pneg %p129
        %p325 = pneg %p126
        %p326 = pneg %p150
        %p327 = pneg %p147
        %p328 = pneg %p171
        %p329 = pneg %p168
        %p330 = pneg %p192
        %p331 = pneg %p189
        %p332 = pneg %p213
        %p333 = pneg %p210
        %p334 = pneg %p239
        %p335 = pneg %p236
        %s336 = sand.u32 %s226, 1
        %s337 = scalar_lea.sflag [#allocation5], %s336
        %s338 = sand.u32 %s226, 1
        %s339 = smul.addr %s338, 32
        %s340 = scalar_lea.vmem [#allocation6], %s339
        %p341 = scmp.lt.s32.totalorder %s24, 1
        %s342 = scalar_select %p341, %s24, 1
        %s343 = smul.addr %s342, 2
        %s344 = smul.addr %s343, 8
        %s345 = scalar_lea.vmem %s0, %s344
        %346 = vst [vmem:[#allocation2] sm:$0x1] 0.0
        %347 = vst [vmem:[#allocation2 + $0x11] sm:$0x1] 0.0
        %v348 = vld [vmem:[%s345] sm:$0xff]
        %v349 = vld [vmem:[%s345 + $0x8] sm:$0xff]
        %350 = vst [vmem:[#allocation2 + $0x1] sm:$0xff] %v348
        %351 = vst [vmem:[#allocation2 + $0x9] sm:$0xff] %v349
        %v352 = vld [vmem:[#allocation2] sm:$0xff]
        %v353 = vld [vmem:[#allocation2 + $0x8] sm:$0xff]
        %v354 = vld [vmem:[#allocation2 + $0x1] sm:$0xff]
        %v355 = vld [vmem:[#allocation2 + $0x9] sm:$0xff]
        %v356 = vld [vmem:[#allocation2 + $0x2] sm:$0xff]
        %v357 = vld [vmem:[#allocation2 + $0xa] sm:$0xff]
        %v358 = vld [vmem:[#allocation3] sm:$0xff]
        %v359 = vld [vmem:[#allocation3 + $0x8] sm:$0xff]
        %v360 = vld [vmem:[#allocation3 + $0x10] sm:$0xff]
        %v361 = vld [vmem:[#allocation3 + $0x18] sm:$0xff]
        %v362 = vld [vmem:[#allocation3 + $0x20] sm:$0xff]
        %v363 = vld [vmem:[#allocation3 + $0x28] sm:$0xff]
        %v364 = vld [vmem:[#allocation3 + $0x30] sm:$0xff]
        %v365 = vld [vmem:[#allocation3 + $0x38] sm:$0xff]
        %v366 = vld [vmem:[#allocation3 + $0x40] sm:$0xff]
        %v367 = vld [vmem:[#allocation3 + $0x48] sm:$0xff]
        %v368 = vld [vmem:[#allocation3 + $0x50] sm:$0xff]
        %v369 = vld [vmem:[#allocation3 + $0x58] sm:$0xff]
        %v370 = vld [vmem:[#allocation3 + $0x60] sm:$0xff]
        %v371 = vld [vmem:[#allocation3 + $0x68] sm:$0xff]
        %v372 = vld [vmem:[#allocation3 + $0x70] sm:$0xff]
        %v373 = vld [vmem:[#allocation3 + $0x78] sm:$0xff]
        %v374 = vld [vmem:[#allocation3 + $0x80] sm:$0xff]
        %v375 = vld [vmem:[#allocation3 + $0x88] sm:$0xff]
        %v376 = vld [vmem:[#allocation3 + $0x90] sm:$0xff]
        %v377 = vld [vmem:[#allocation3 + $0x98] sm:$0xff]
        %v378 = vld [vmem:[#allocation3 + $0xa0] sm:$0xff]
        %v379 = vld [vmem:[#allocation3 + $0xa8] sm:$0xff]
        %v380 = vld [vmem:[#allocation3 + $0xb0] sm:$0xff]
        %v381 = vld [vmem:[#allocation3 + $0xb8] sm:$0xff]
        %v382 = vld [vmem:[#allocation3 + $0xc0] sm:$0xff]
        %v383 = vld [vmem:[#allocation3 + $0xc8] sm:$0xff]
        %v384 = vld [vmem:[#allocation3 + $0xd0] sm:$0xff]
        %v385 = vld [vmem:[#allocation3 + $0xd8] sm:$0xff]
        %v386 = vld [vmem:[#allocation3 + $0xe0] sm:$0xff]
        %v387 = vld [vmem:[#allocation3 + $0xe8] sm:$0xff]
        %v388 = vld [vmem:[#allocation3 + $0xf0] sm:$0xff]
        %v389 = vld [vmem:[#allocation3 + $0xf8] sm:$0xff]
        %v390 = vld [vmem:[#allocation3 + $0x100] sm:$0xff]
        %v391 = vld [vmem:[#allocation3 + $0x108] sm:$0xff]
        %v392 = vld [vmem:[#allocation3 + $0x110] sm:$0xff]
        %v393 = vld [vmem:[#allocation3 + $0x118] sm:$0xff]
        %v394 = vld [vmem:[#allocation3 + $0x120] sm:$0xff]
        %v395 = vld [vmem:[#allocation3 + $0x128] sm:$0xff]
        %v396 = vld [vmem:[#allocation3 + $0x130] sm:$0xff]
        %v397 = vld [vmem:[#allocation3 + $0x138] sm:$0xff]
        %v398 = vld [vmem:[#allocation3 + $0x140] sm:$0xff]
        %v399 = vld [vmem:[#allocation3 + $0x148] sm:$0xff]
        %v400 = vld [vmem:[#allocation3 + $0x150] sm:$0xff]
        %v401 = vld [vmem:[#allocation3 + $0x158] sm:$0xff]
        %v402 = vld [vmem:[#allocation3 + $0x160] sm:$0xff]
        %v403 = vld [vmem:[#allocation3 + $0x168] sm:$0xff]
        %v404 = vld [vmem:[#allocation3 + $0x170] sm:$0xff]
        %v405 = vld [vmem:[#allocation3 + $0x178] sm:$0xff]
        %406 = vmatprep.subr.mxu0 0.0
        %407 = vmatpush1.msra.mxu0 %v358
        %408 = vmatprep.subr.mxu0 0.0
        %409 = vmatpush1.msra.mxu0 %v359
        %410 = vmatprep.subr.mxu0 0.0
        %411 = vmatpush1.msra.mxu0 %v360
        %412 = vmatprep.subr.mxu0 0.0
        %413 = vmatpush1.msra.mxu0 %v361
        %414 = vmatprep.subr.mxu0 0.0
        %415 = vmatpush1.msra.mxu0 %v362
        %416 = vmatprep.subr.mxu0 0.0
        %417 = vmatpush1.msra.mxu0 %v363
        %418 = vmatprep.subr.mxu0 0.0
        %419 = vmatpush1.msra.mxu0 %v364
        %420 = vmatprep.subr.mxu0 0.0
        %421 = vmatpush1.msra.mxu0 %v365
        %422 = vmatprep.subr.mxu0 0.0
        %423 = vmatpush1.msra.mxu0 %v366
        %424 = vmatprep.subr.mxu0 0.0
        %425 = vmatpush1.msra.mxu0 %v367
        %426 = vmatprep.subr.mxu0 0.0
        %427 = vmatpush1.msra.mxu0 %v368
        %428 = vmatprep.subr.mxu0 0.0
        %429 = vmatpush1.msra.mxu0 %v369
        %430 = vmatprep.subr.mxu0 0.0
        %431 = vmatpush1.msra.mxu0 %v370
        %432 = vmatprep.subr.mxu0 0.0
        %433 = vmatpush1.msra.mxu0 %v371
        %434 = vmatprep.subr.mxu0 0.0
        %435 = vmatpush1.msra.mxu0 %v372
        %436 = vmatprep.subr.mxu0 0.0
        %437 = vmatpush1.msra.mxu0 %v373
        %438 = vmatprep.subr.mxu0 0.0
        %439 = vmatpush1.msra.mxu0 %v374
        %440 = vmatprep.subr.mxu0 0.0
        %441 = vmatpush1.msra.mxu0 %v375
        %442 = vmatprep.subr.mxu0 0.0
        %443 = vmatpush1.msra.mxu0 %v376
        %444 = vmatprep.subr.mxu0 0.0
        %445 = vmatpush1.msra.mxu0 %v377
        %446 = vmatprep.subr.mxu0 0.0
        %447 = vmatpush1.msra.mxu0 %v378
        %448 = vmatprep.subr.mxu0 0.0
        %449 = vmatpush1.msra.mxu0 %v379
        %450 = vmatprep.subr.mxu0 0.0
        %451 = vmatpush1.msra.mxu0 %v380
        %452 = vmatprep.subr.mxu0 0.0
        %453 = vmatpush1.msra.mxu0 %v381
        %454 = vmatprep.subr.mxu0 0.0
        %455 = vmatpush1.msra.mxu0 %v382
        %456 = vmatprep.subr.mxu0 0.0
        %457 = vmatpush1.msra.mxu0 %v383
        %458 = vmatprep.subr.mxu0 0.0
        %459 = vmatpush1.msra.mxu0 %v384
        %460 = vmatprep.subr.mxu0 0.0
        %461 = vmatpush1.msra.mxu0 %v385
        %462 = vmatprep.subr.mxu0 0.0
        %463 = vmatpush1.msra.mxu0 %v386
        %464 = vmatprep.subr.mxu0 0.0
        %465 = vmatpush1.msra.mxu0 %v387
        %466 = vmatprep.subr.mxu0 0.0
        %467 = vmatpush1.msra.mxu0 %v388
        %468 = vmatprep.subr.mxu0 0.0
        %469 = vmatpush1.msra.mxu0 %v389
        %470 = vmatprep.mubr.f32.mxu0 %v354
        %471 = vmatmul.mubr.f32.gmra.mrb[0].mxu0 %v352
        %v472 = vpop.f32.mrb[0].mxu0
        %v473 = vadd.f32 0.0, %v472
        %v474 = vpop.f32.mrb[0].mxu0
        %475 = vmatprep.mubr.f32.mxu0 %v355
        %476 = vmatmul.mubr.f32.gmra.mrb[0].mxu0 %v353
        %v477 = vpop.f32.mrb[0].mxu0
        %v478 = vadd.f32 0.0, %v477
        %v479 = vpop.f32.mrb[0].mxu0
        %480 = vdwg.mxu0
        %481 = vmatprep.subr.mxu0 0.0
        %482 = vmatpush1.msra.mxu0 %v390
        %483 = vmatprep.subr.mxu0 0.0
        %484 = vmatpush1.msra.mxu0 %v391
        %485 = vmatprep.subr.mxu0 0.0
        %486 = vmatpush1.msra.mxu0 %v392
        %487 = vmatprep.subr.mxu0 0.0
        %488 = vmatpush1.msra.mxu0 %v393
        %489 = vmatprep.subr.mxu0 0.0
        %490 = vmatpush1.msra.mxu0 %v394
        %491 = vmatprep.subr.mxu0 0.0
        %492 = vmatpush1.msra.mxu0 %v395
        %493 = vmatprep.subr.mxu0 0.0
        %494 = vmatpush1.msra.mxu0 %v396
        %495 = vmatprep.subr.mxu0 0.0
        %496 = vmatpush1.msra.mxu0 %v397
        %497 = vmatprep.subr.mxu0 0.0
        %498 = vmatpush1.msra.mxu0 %v398
        %499 = vmatprep.subr.mxu0 0.0
        %500 = vmatpush1.msra.mxu0 %v399
        %501 = vmatprep.subr.mxu0 0.0
        %502 = vmatpush1.msra.mxu0 %v400
        %503 = vmatprep.subr.mxu0 0.0
        %504 = vmatpush1.msra.mxu0 %v401
        %505 = vmatprep.subr.mxu0 0.0
        %506 = vmatpush1.msra.mxu0 %v402
        %507 = vmatprep.subr.mxu0 0.0
        %508 = vmatpush1.msra.mxu0 %v403
        %509 = vmatprep.subr.mxu0 0.0
        %510 = vmatpush1.msra.mxu0 %v404
        %511 = vmatprep.subr.mxu0 0.0
        %512 = vmatpush1.msra.mxu0 %v405
        %513 = vmatprep.subr.mxu0 0.0
        %514 = vmatpush1.msra.mxu0 0.0
        %515 = vmatprep.subr.mxu0 0.0
        %516 = vmatpush1.msra.mxu0 0.0
        %517 = vmatprep.subr.mxu0 0.0
        %518 = vmatpush1.msra.mxu0 0.0
        %519 = vmatprep.subr.mxu0 0.0
        %520 = vmatpush1.msra.mxu0 0.0
        %521 = vmatprep.subr.mxu0 0.0
        %522 = vmatpush1.msra.mxu0 0.0
        %523 = vmatprep.subr.mxu0 0.0
        %524 = vmatpush1.msra.mxu0 0.0
        %525 = vmatprep.subr.mxu0 0.0
        %526 = vmatpush1.msra.mxu0 0.0
        %527 = vmatprep.subr.mxu0 0.0
        %528 = vmatpush1.msra.mxu0 0.0
        %529 = vmatprep.subr.mxu0 0.0
        %530 = vmatpush1.msra.mxu0 0.0
        %531 = vmatprep.subr.mxu0 0.0
        %532 = vmatpush1.msra.mxu0 0.0
        %533 = vmatprep.subr.mxu0 0.0
        %534 = vmatpush1.msra.mxu0 0.0
        %535 = vmatprep.subr.mxu0 0.0
        %536 = vmatpush1.msra.mxu0 0.0
        %537 = vmatprep.subr.mxu0 0.0
        %538 = vmatpush1.msra.mxu0 0.0
        %539 = vmatprep.subr.mxu0 0.0
        %540 = vmatpush1.msra.mxu0 0.0
        %541 = vmatprep.subr.mxu0 0.0
        %542 = vmatpush1.msra.mxu0 0.0
        %543 = vmatprep.subr.mxu0 0.0
        %544 = vmatpush1.msra.mxu0 0.0
        %545 = vmatprep.mubr.f32.mxu0 0.0
        %546 = vmatmul.mubr.f32.gmra.mrb[0].mxu0 %v356
        %v547 = vpop.f32.mrb[0].mxu0
        %v548 = vadd.f32 %v473, %v547
        %v549 = vpop.f32.mrb[0].mxu0
        %550 = vmatprep.mubr.f32.mxu0 0.0
        %551 = vmatmul.mubr.f32.gmra.mrb[0].mxu0 %v357
        %v552 = vpop.f32.mrb[0].mxu0
        %v553 = vadd.f32 %v478, %v552
        %v554 = vpop.f32.mrb[0].mxu0
        %555 = vdwg.mxu0
        %v556 = vld [vmem:[%s2] sm:$0x1]
        %v558 = vlaneseq
        %v559 = vshrl.u32 %v558, 7
        %v560 = vsub.s32 0, %v559
        %v561 = vrot.slane %v556, %v560
        %v563 = vmul.f32 %v548, %v561
        %v564 = vmul.f32 %v553, %v561
        %v565 = vld [vmem:[%s3] sm:$0x1]
        %v567 = vlaneseq
        %v568 = vshrl.u32 %v567, 7
        %v569 = vsub.s32 0, %v568
        %v570 = vrot.slane %v565, %v569
        %v572 = vadd.f32 %v563, %v570
        %v573 = vadd.f32 %v564, %v570
        %v574 = vmax.f32 %v572, 0.0
        %v575 = vmax.f32 %v573, 0.0
        %v576 = vld [vmem:[%s4] sm:$0xff]
        %v577 = vld [vmem:[%s4 + $0x8] sm:$0xff]
        %v578 = vld [vmem:[%s4 + $0x10] sm:$0xff]
        %v579 = vld [vmem:[%s4 + $0x18] sm:$0xff]
        %v580 = vld [vmem:[%s4 + $0x20] sm:$0xff]
        %v581 = vld [vmem:[%s4 + $0x28] sm:$0xff]
        %v582 = vld [vmem:[%s4 + $0x30] sm:$0xff]
        %v583 = vld [vmem:[%s4 + $0x38] sm:$0xff]
        %v584 = vld [vmem:[%s4 + $0x40] sm:$0xff]
        %v585 = vld [vmem:[%s4 + $0x48] sm:$0xff]
        %v586 = vld [vmem:[%s4 + $0x50] sm:$0xff]
        %v587 = vld [vmem:[%s4 + $0x58] sm:$0xff]
        %v588 = vld [vmem:[%s4 + $0x60] sm:$0xff]
        %v589 = vld [vmem:[%s4 + $0x68] sm:$0xff]
        %v590 = vld [vmem:[%s4 + $0x70] sm:$0xff]
        %v591 = vld [vmem:[%s4 + $0x78] sm:$0xff]
        %592 = vmatprep.subr.mxu0 0.0
        %593 = vmatpush1.msra.mxu0 %v576
        %594 = vmatprep.subr.mxu0 0.0
        %595 = vmatpush1.msra.mxu0 %v577
        %596 = vmatprep.subr.mxu0 0.0
        %597 = vmatpush1.msra.mxu0 %v578
        %598 = vmatprep.subr.mxu0 0.0
        %599 = vmatpush1.msra.mxu0 %v579
        %600 = vmatprep.subr.mxu0 0.0
        %601 = vmatpush1.msra.mxu0 %v580
        %602 = vmatprep.subr.mxu0 0.0
        %603 = vmatpush1.msra.mxu0 %v581
        %604 = vmatprep.subr.mxu0 0.0
        %605 = vmatpush1.msra.mxu0 %v582
        %606 = vmatprep.subr.mxu0 0.0
        %607 = vmatpush1.msra.mxu0 %v583
        %608 = vmatprep.subr.mxu0 0.0
        %609 = vmatpush1.msra.mxu0 %v584
        %610 = vmatprep.subr.mxu0 0.0
        %611 = vmatpush1.msra.mxu0 %v585
        %612 = vmatprep.subr.mxu0 0.0
        %613 = vmatpush1.msra.mxu0 %v586
        %614 = vmatprep.subr.mxu0 0.0
        %615 = vmatpush1.msra.mxu0 %v587
        %616 = vmatprep.subr.mxu0 0.0
        %617 = vmatpush1.msra.mxu0 %v588
        %618 = vmatprep.subr.mxu0 0.0
        %619 = vmatpush1.msra.mxu0 %v589
        %620 = vmatprep.subr.mxu0 0.0
        %621 = vmatpush1.msra.mxu0 %v590
        %622 = vmatprep.subr.mxu0 0.0
        %623 = vmatpush1.msra.mxu0 %v591
        %624 = vmatprep.subr.mxu0 0.0
        %625 = vmatpush1.msra.mxu0 0.0
        %626 = vmatprep.subr.mxu0 0.0
        %627 = vmatpush1.msra.mxu0 0.0
        %628 = vmatprep.subr.mxu0 0.0
        %629 = vmatpush1.msra.mxu0 0.0
        %630 = vmatprep.subr.mxu0 0.0
        %631 = vmatpush1.msra.mxu0 0.0
        %632 = vmatprep.subr.mxu0 0.0
        %633 = vmatpush1.msra.mxu0 0.0
        %634 = vmatprep.subr.mxu0 0.0
        %635 = vmatpush1.msra.mxu0 0.0
        %636 = vmatprep.subr.mxu0 0.0
        %637 = vmatpush1.msra.mxu0 0.0
        %638 = vmatprep.subr.mxu0 0.0
        %639 = vmatpush1.msra.mxu0 0.0
        %640 = vmatprep.subr.mxu0 0.0
        %641 = vmatpush1.msra.mxu0 0.0
        %642 = vmatprep.subr.mxu0 0.0
        %643 = vmatpush1.msra.mxu0 0.0
        %644 = vmatprep.subr.mxu0 0.0
        %645 = vmatpush1.msra.mxu0 0.0
        %646 = vmatprep.subr.mxu0 0.0
        %647 = vmatpush1.msra.mxu0 0.0
        %648 = vmatprep.subr.mxu0 0.0
        %649 = vmatpush1.msra.mxu0 0.0
        %650 = vmatprep.subr.mxu0 0.0
        %651 = vmatpush1.msra.mxu0 0.0
        %652 = vmatprep.subr.mxu0 0.0
        %653 = vmatpush1.msra.mxu0 0.0
        %654 = vmatprep.subr.mxu0 0.0
        %655 = vmatpush1.msra.mxu0 0.0
        %656 = vmatprep.mubr.f32.mxu0 0.0
        %657 = vmatmul.mubr.f32.gmra.mrb[0].mxu0 %v574
        %v658 = vpop.f32.mrb[0].mxu0
        %v659 = vadd.f32 0.0, %v658
        %v660 = vpop.f32.mrb[0].mxu0
        %661 = vmatprep.mubr.f32.mxu0 0.0
        %662 = vmatmul.mubr.f32.gmra.mrb[0].mxu0 %v575
        %v663 = vpop.f32.mrb[0].mxu0
        %v664 = vadd.f32 0.0, %v663
        %v665 = vpop.f32.mrb[0].mxu0
        %666 = vdwg.mxu0
        %v667 = vld [vmem:[%s5] sm:$0xff]
        %v668 = vld [vmem:[%s5 + $0x8] sm:$0xff]
        %v669 = vld [vmem:[%s5 + $0x10] sm:$0xff]
        %v670 = vld [vmem:[%s5 + $0x18] sm:$0xff]
        %vm671 = vcmask 130048
        %v673 = vsel %vm671, %v667, 0
        %v676 = vsel %vm671, %v668, 0
        %v679 = vsel %vm671, %v669, 0
        %v682 = vsel %vm671, %v670, 0
        %684 = vmatprep.subr.mxu0 0.0
        %685 = vmatpush1.msra.mxu0 %v659
        %686 = vmatprep.subr.mxu0 0.0
        %687 = vmatpush1.msra.mxu0 %v664
        %688 = vmatprep.subr.mxu0 0.0
        %689 = vmatpush1.msra.mxu0 0.0
        %690 = vmatprep.subr.mxu0 0.0
        %691 = vmatpush1.msra.mxu0 0.0
        %692 = vmatprep.subr.mxu0 0.0
        %693 = vmatpush1.msra.mxu0 0.0
        %694 = vmatprep.subr.mxu0 0.0
        %695 = vmatpush1.msra.mxu0 0.0
        %696 = vmatprep.subr.mxu0 0.0
        %697 = vmatpush1.msra.mxu0 0.0
        %698 = vmatprep.subr.mxu0 0.0
        %699 = vmatpush1.msra.mxu0 0.0
        %700 = vmatprep.subr.mxu0 0.0
        %701 = vmatpush1.msra.mxu0 0.0
        %702 = vmatprep.subr.mxu0 0.0
        %703 = vmatpush1.msra.mxu0 0.0
        %704 = vmatprep.subr.mxu0 0.0
        %705 = vmatpush1.msra.mxu0 0.0
        %706 = vmatprep.subr.mxu0 0.0
        %707 = vmatpush1.msra.mxu0 0.0
        %708 = vmatprep.subr.mxu0 0.0
        %709 = vmatpush1.msra.mxu0 0.0
        %710 = vmatprep.subr.mxu0 0.0
        %711 = vmatpush1.msra.mxu0 0.0
        %712 = vmatprep.subr.mxu0 0.0
        %713 = vmatpush1.msra.mxu0 0.0
        %714 = vmatprep.subr.mxu0 0.0
        %715 = vmatpush1.msra.mxu0 0.0
        %716 = vmatprep.subr.mxu0 0.0
        %717 = vmatpush1.msra.mxu0 0.0
        %718 = vmatprep.subr.mxu0 0.0
        %719 = vmatpush1.msra.mxu0 0.0
        %720 = vmatprep.subr.mxu0 0.0
        %721 = vmatpush1.msra.mxu0 0.0
        %722 = vmatprep.subr.mxu0 0.0
        %723 = vmatpush1.msra.mxu0 0.0
        %724 = vmatprep.subr.mxu0 0.0
        %725 = vmatpush1.msra.mxu0 0.0
        %726 = vmatprep.subr.mxu0 0.0
        %727 = vmatpush1.msra.mxu0 0.0
        %728 = vmatprep.subr.mxu0 0.0
        %729 = vmatpush1.msra.mxu0 0.0
        %730 = vmatprep.subr.mxu0 0.0
        %731 = vmatpush1.msra.mxu0 0.0
        %732 = vmatprep.subr.mxu0 0.0
        %733 = vmatpush1.msra.mxu0 0.0
        %734 = vmatprep.subr.mxu0 0.0
        %735 = vmatpush1.msra.mxu0 0.0
        %736 = vmatprep.subr.mxu0 0.0
        %737 = vmatpush1.msra.mxu0 0.0
        %738 = vmatprep.subr.mxu0 0.0
        %739 = vmatpush1.msra.mxu0 0.0
        %740 = vmatprep.subr.mxu0 0.0
        %741 = vmatpush1.msra.mxu0 0.0
        %742 = vmatprep.subr.mxu0 0.0
        %743 = vmatpush1.msra.mxu0 0.0
        %744 = vmatprep.subr.mxu0 0.0
        %745 = vmatpush1.msra.mxu0 0.0
        %746 = vmatprep.subr.mxu0 0.0
        %747 = vmatpush1.msra.mxu0 0.0
        %748 = vmatprep.mubr.f32.mxu0 0.0
        %749 = vmatmul.mubr.f32.gmra.mrb[0].mxu0 %v673
        %v750 = vpop.f32.mrb[0].mxu0
        %v751 = vadd.f32 0.0, %v750
        %v752 = vpop.f32.mrb[0].mxu0
        %753 = vmatprep.mubr.f32.mxu0 0.0
        %754 = vmatmul.mubr.f32.gmra.mrb[0].mxu0 %v676
        %v755 = vpop.f32.mrb[0].mxu0
        %v756 = vadd.f32 0.0, %v755
        %v757 = vpop.f32.mrb[0].mxu0
        %758 = vmatprep.mubr.f32.mxu0 0.0
        %759 = vmatmul.mubr.f32.gmra.mrb[0].mxu0 %v679
        %v760 = vpop.f32.mrb[0].mxu0
        %v761 = vadd.f32 0.0, %v760
        %v762 = vpop.f32.mrb[0].mxu0
        %763 = vmatprep.mubr.f32.mxu0 0.0
        %764 = vmatmul.mubr.f32.gmra.mrb[0].mxu0 %v682
        %v765 = vpop.f32.mrb[0].mxu0
        %v766 = vadd.f32 0.0, %v765
        %v767 = vpop.f32.mrb[0].mxu0
        %768 = vdwg.mxu0
        %v769 = vld [vmem:[%s6] sm:$0xff]
        %v770 = vld [vmem:[%s6 + $0x8] sm:$0xff]
        %v771 = vld [vmem:[%s6 + $0x10] sm:$0xff]
        %v772 = vld [vmem:[%s6 + $0x18] sm:$0xff]
        %v773 = vld [vmem:[%s6 + $0x20] sm:$0xff]
        %v774 = vld [vmem:[%s6 + $0x28] sm:$0xff]
        %v775 = vld [vmem:[%s6 + $0x30] sm:$0xff]
        %v776 = vld [vmem:[%s6 + $0x38] sm:$0xff]
        %vm777 = vcmask 523264
        %v779 = vsel %vm777, %v751, 0
        %v782 = vsel %vm777, %v756, 0
        %v785 = vsel %vm777, %v761, 0
        %v788 = vsel %vm777, %v766, 0
        %790 = vmatprep.subr.mxu0 0.0
        %791 = vmatpush1.msra.mxu0 %v769
        %792 = vmatprep.subr.mxu0 0.0
        %793 = vmatpush1.msra.mxu0 %v770
        %794 = vmatprep.subr.mxu0 0.0
        %795 = vmatpush1.msra.mxu0 %v771
        %796 = vmatprep.subr.mxu0 0.0
        %797 = vmatpush1.msra.mxu0 %v772
        %798 = vmatprep.subr.mxu0 0.0
        %799 = vmatpush1.msra.mxu0 %v773
        %800 = vmatprep.subr.mxu0 0.0
        %801 = vmatpush1.msra.mxu0 %v774
        %802 = vmatprep.subr.mxu0 0.0
        %803 = vmatpush1.msra.mxu0 %v775
        %804 = vmatprep.subr.mxu0 0.0
        %805 = vmatpush1.msra.mxu0 %v776
        %806 = vmatprep.subr.mxu0 0.0
        %807 = vmatpush1.msra.mxu0 0.0
        %808 = vmatprep.subr.mxu0 0.0
        %809 = vmatpush1.msra.mxu0 0.0
        %810 = vmatprep.subr.mxu0 0.0
        %811 = vmatpush1.msra.mxu0 0.0
        %812 = vmatprep.subr.mxu0 0.0
        %813 = vmatpush1.msra.mxu0 0.0
        %814 = vmatprep.subr.mxu0 0.0
        %815 = vmatpush1.msra.mxu0 0.0
        %816 = vmatprep.subr.mxu0 0.0
        %817 = vmatpush1.msra.mxu0 0.0
        %818 = vmatprep.subr.mxu0 0.0
        %819 = vmatpush1.msra.mxu0 0.0
        %820 = vmatprep.subr.mxu0 0.0
        %821 = vmatpush1.msra.mxu0 0.0
        %822 = vmatprep.subr.mxu0 0.0
        %823 = vmatpush1.msra.mxu0 0.0
        %824 = vmatprep.subr.mxu0 0.0
        %825 = vmatpush1.msra.mxu0 0.0
        %826 = vmatprep.subr.mxu0 0.0
        %827 = vmatpush1.msra.mxu0 0.0
        %828 = vmatprep.subr.mxu0 0.0
        %829 = vmatpush1.msra.mxu0 0.0
        %830 = vmatprep.subr.mxu0 0.0
        %831 = vmatpush1.msra.mxu0 0.0
        %832 = vmatprep.subr.mxu0 0.0
        %833 = vmatpush1.msra.mxu0 0.0
        %834 = vmatprep.subr.mxu0 0.0
        %835 = vmatpush1.msra.mxu0 0.0
        %836 = vmatprep.subr.mxu0 0.0
        %837 = vmatpush1.msra.mxu0 0.0
        %838 = vmatprep.subr.mxu0 0.0
        %839 = vmatpush1.msra.mxu0 0.0
        %840 = vmatprep.subr.mxu0 0.0
        %841 = vmatpush1.msra.mxu0 0.0
        %842 = vmatprep.subr.mxu0 0.0
        %843 = vmatpush1.msra.mxu0 0.0
        %844 = vmatprep.subr.mxu0 0.0
        %845 = vmatpush1.msra.mxu0 0.0
        %846 = vmatprep.subr.mxu0 0.0
        %847 = vmatpush1.msra.mxu0 0.0
        %848 = vmatprep.subr.mxu0 0.0
        %849 = vmatpush1.msra.mxu0 0.0
        %850 = vmatprep.subr.mxu0 0.0
        %851 = vmatpush1.msra.mxu0 0.0
        %852 = vmatprep.subr.mxu0 0.0
        %853 = vmatpush1.msra.mxu0 0.0
        %854 = vmatprep.mubr.f32.mxu0 0.0
        %855 = vmatmul.mubr.f32.gmra.mrb[0].mxu0 %v779
        %v856 = vpop.f32.mrb[0].mxu0
        %v857 = vadd.f32 0.0, %v856
        %v858 = vpop.f32.mrb[0].mxu0
        %859 = vmatprep.mubr.f32.mxu0 0.0
        %860 = vmatmul.mubr.f32.gmra.mrb[0].mxu0 %v782
        %v861 = vpop.f32.mrb[0].mxu0
        %v862 = vadd.f32 0.0, %v861
        %v863 = vpop.f32.mrb[0].mxu0
        %864 = vmatprep.mubr.f32.mxu0 0.0
        %865 = vmatmul.mubr.f32.gmra.mrb[0].mxu0 %v785
        %v866 = vpop.f32.mrb[0].mxu0
        %v867 = vadd.f32 0.0, %v866
        %v868 = vpop.f32.mrb[0].mxu0
        %869 = vmatprep.mubr.f32.mxu0 0.0
        %870 = vmatmul.mubr.f32.gmra.mrb[0].mxu0 %v788
        %v871 = vpop.f32.mrb[0].mxu0
        %v872 = vadd.f32 0.0, %v871
        %v873 = vpop.f32.mrb[0].mxu0
        %874 = vdwg.mxu0
        %v875 = vld [vmem:[%s7] sm:$0x1]
        %v877 = vlaneseq
        %v878 = vshrl.u32 %v877, 7
        %v879 = vsub.s32 0, %v878
        %v880 = vrot.slane %v875, %v879
        %v882 = vmul.f32 %v857, %v880
        %v883 = vmul.f32 %v862, %v880
        %v884 = vmul.f32 %v867, %v880
        %v885 = vmul.f32 %v872, %v880
        %v886 = vld [vmem:[%s8] sm:$0x1]
        %v888 = vlaneseq
        %v889 = vshrl.u32 %v888, 7
        %v890 = vsub.s32 0, %v889
        %v891 = vrot.slane %v886, %v890
        %v893 = vadd.f32 %v882, %v891
        %v894 = vadd.f32 %v883, %v891
        %v895 = vadd.f32 %v884, %v891
        %v896 = vadd.f32 %v885, %v891
        %v897 = vmax.f32 %v893, 0.0
        %v898 = vmax.f32 %v894, 0.0
        %v899 = vmax.f32 %v895, 0.0
        %v900 = vmax.f32 %v896, 0.0
        %901 = vst [vmem:[%s340] sm:$0xff] %v897
        %902 = vst [vmem:[%s340 + $0x8] sm:$0xff] %v898
        %903 = vst [vmem:[%s340 + $0x10] sm:$0xff] %v899
        %904 = vst [vmem:[%s340 + $0x18] sm:$0xff] %v900
        %s905 = sand.u32 %s226, 1
        %s906 = scalar_lea.sflag [#allocation5], %s905
        %s907 = sand.u32 %s226, 1
        %s908 = smul.addr %s907, 32
        %s909 = scalar_lea.vmem [#allocation6], %s908
        // Predicated region
        $region61: #{tpu_custom_call.1} parent=55 // pred_check
          %p910 = pneg %p236
        $region62: #{tpu_custom_call.1} parent=55 // pred_check_branch
          %912 = sbr.rel (%p910) target = $region64
        $region63: #{tpu_custom_call.1} parent=55 // pred_region
          %s914 = ssub.s32 512, 512
          %915 = vsyncadd %s906, %s914
          %s916 = smul.addr %s24, 4
          %s917 = smul.addr %s916, 128
          %s918 = scalar_lea.hbm %s9, %s917
          %s919 = sshll.u32 %s909, 4
          %s920 = int_to_ptr.vmem [resolvable:$true] %s919
          %925 = dma.vmem_to_hbm [thread:$0]  %s920, 512, %s918, %s906, 128, 128, 8
        $region64: #{tpu_custom_call.1} parent=55 // pred_fallthru
          _
      $region56: #{tpu_custom_call.1} parent=5 // pred_fallthru
        _
      %p926 = scmp.le.s32.totalorder 2, %s19
      // Predicated region
      $region65: #{tpu_custom_call.1} parent=5 // pred_check
        %p927 = pneg %p926
      $region66: #{tpu_custom_call.1} parent=5 // pred_check_branch
        %929 = sbr.rel (%p927) target = $region68
      $region67: #{tpu_custom_call.1} parent=5 // pred_region
        %s930 = ssub.s32 %s19, 2
        // Predicated region
        $region69: #{tpu_custom_call.1} parent=67 // pred_check
          %p931 = pneg %p242
        $region70: #{tpu_custom_call.1} parent=67 // pred_check_branch
          %933 = sbr.rel (%p931) target = $region72
        $region71: #{tpu_custom_call.1} parent=67 // pred_region
          %s934 = sand.u32 %s227, 1
          %s935 = scalar_lea.sflag [#allocation5], %s934
          %s936 = sand.u32 %s227, 1
          %s937 = smul.addr %s936, 32
          %s938 = scalar_lea.vmem [#allocation6], %s937
          %939 = dma.done %s935, 512
        $region72: #{tpu_custom_call.1} parent=67 // pred_fallthru
          _
      $region68: #{tpu_custom_call.1} parent=5 // pred_fallthru
        _
    $region6: #{tpu_custom_call.1} parent=1 // loop_footer
      %s23 = sadd.s32 1, %s19
    $region7: #{tpu_custom_call.1} parent=1 // loop_footer_branch
      %18 = sbr.rel target = $region3
    $region8: #{tpu_custom_call.1} parent=1 // loop_exit
      _
    %940 = vsyncpa [#allocation4], 1
    %s941 = scalar_lea.sflag [#allocation4], 1
    %942 = vsyncpa %s941, 1
    %943 = vsyncpa [#allocation5], 1
    %s944 = scalar_lea.sflag [#allocation5], 1
    %945 = vsyncpa %s944, 1

</llo_original>
